<compile_context>
chip_gen: v7x
topology: tpu7x:2x2x1
jax: 0.10.0
libtpu: 0.0.40
codegen_flags: <defaults>
</compile_context>

<pallas_src>
import jax
import jax.numpy as jnp
from jax.experimental import pallas as pl
from jax.experimental.pallas import tpu as pltpu

BN_EPS = 1e-5
LANE = 128


def projector_kernel(x_ref, w1_ref, b1_ref, gamma_ref, beta_ref,
                     w2_ref, b2_ref, o_ref, acc_ref):
    # grid = (n, k): n tiles the output features (parallel), k tiles the
    # hidden features (K-reduction of the second matmul, "arbitrary").
    k = pl.program_id(1)

    @pl.when(k == 0)
    def _():
        acc_ref[...] = jnp.zeros_like(acc_ref)

    # ---- Linear 1, one hidden tile (MXU: bf16 operands, f32 accumulation) --
    h = jnp.dot(x_ref[...], w1_ref[...], preferred_element_type=jnp.float32)
    h = h + b1_ref[...]                                   # (B, TH) f32

    # ---- BatchNorm1d (training mode, biased batch stats over axis 0).
    # Stats are per-feature, so hidden-axis tiling keeps them exact.
    # Single fused pass: sum + sum-of-squares (one XLU reduction saved).
    inv_b = 1.0 / x_ref.shape[0]                          # static constant
    s = jnp.sum(h, axis=0, keepdims=True)
    ss = jnp.sum(h * h, axis=0, keepdims=True)
    mean = s * inv_b
    var = ss * inv_b - mean * mean
    scale = gamma_ref[...] * jax.lax.rsqrt(var + BN_EPS)  # (1, TH)
    h_bn = (h - mean) * scale + beta_ref[...]

    # ---- ReLU (VPU, f32) ----
    h_relu = jnp.maximum(h_bn, 0.0)

    # ---- Linear 2: partial product for this hidden tile, accumulated in f32.
    acc_ref[...] += jnp.dot(h_relu.astype(jnp.bfloat16), w2_ref[...],
                            preferred_element_type=jnp.float32)

    @pl.when(k == pl.num_programs(1) - 1)
    def _():
        o_ref[...] = (acc_ref[...] + b2_ref[...]).astype(o_ref.dtype)


def _round_up(n, m):
    return ((n + m - 1) // m) * m


def _pad_to(a, shape):
    if a.shape == tuple(shape):
        return a
    widths = [(0, t - s) for s, t in zip(a.shape, shape)]
    return jnp.pad(a, widths)


def projector_forward(x, w1, b1, gamma, beta, w2, b2, *, th=256, tn=128):
    """Fused projector forward. x: (B, in_dim) f32; w1: (in_dim, hidden);
    w2: (hidden, out_dim); b1/gamma/beta: (hidden,); b2: (out_dim,)."""
    B, in_dim = x.shape
    hidden = w1.shape[1]
    out_dim = w2.shape[1]

    # Lane-dense padding (zero pad is a mathematical no-op, see header note).
    in_p = _round_up(in_dim, LANE)
    hid_p = _round_up(hidden, LANE)
    out_p = _round_up(out_dim, LANE)

    th = min(th, hid_p)
    if hid_p % th:
        th = LANE                       # fallback tile that always divides
    tn = min(tn, out_p)
    if out_p % tn:
        tn = LANE

    # Pad + cast MXU operands to bf16 (halves weight DMA bytes, bf16-native
    # MXU on v6e/v7x); BN / bias params stay f32.
    x_bf = _pad_to(x, (B, in_p)).astype(jnp.bfloat16)
    w1_bf = _pad_to(w1, (in_p, hid_p)).astype(jnp.bfloat16)
    w2_bf = _pad_to(w2, (hid_p, out_p)).astype(jnp.bfloat16)
    b1_p = _pad_to(b1.reshape(1, -1).astype(jnp.float32), (1, hid_p))
    gamma_p = _pad_to(gamma.reshape(1, -1).astype(jnp.float32), (1, hid_p))
    beta_p = _pad_to(beta.reshape(1, -1).astype(jnp.float32), (1, hid_p))
    b2_p = _pad_to(b2.reshape(1, -1).astype(jnp.float32), (1, out_p))

    grid = (out_p // tn, hid_p // th)

    out = pl.pallas_call(
        projector_kernel,
        out_shape=jax.ShapeDtypeStruct((B, out_p), jnp.float32),
        grid_spec=pltpu.PrefetchScalarGridSpec(
            num_scalar_prefetch=0,
            grid=grid,
            in_specs=[
                pl.BlockSpec((B, in_p), lambda n, k: (0, 0)),     # x (resident)
                pl.BlockSpec((in_p, th), lambda n, k: (0, k)),    # W1 tile
                pl.BlockSpec((1, th), lambda n, k: (0, k)),       # b1 tile
                pl.BlockSpec((1, th), lambda n, k: (0, k)),       # gamma tile
                pl.BlockSpec((1, th), lambda n, k: (0, k)),       # beta tile
                pl.BlockSpec((th, tn), lambda n, k: (k, n)),      # W2 tile
                pl.BlockSpec((1, tn), lambda n, k: (0, n)),       # b2 tile
            ],
            out_specs=pl.BlockSpec((B, tn), lambda n, k: (0, n)),
            scratch_shapes=[pltpu.VMEM((B, tn), jnp.float32)],
        ),
        compiler_params=pltpu.CompilerParams(
            dimension_semantics=("parallel", "arbitrary"),
            vmem_limit_bytes=64 * 1024 * 1024,
        ),
    )(x_bf, w1_bf, b1_p, gamma_p, beta_p, w2_bf, b2_p)

    return out[:, :out_dim] if out_p != out_dim else out


def projector_reference(x, w1, b1, gamma, beta, w2, b2):
    """Pure-JAX reference matching the PyTorch module's training-mode forward.
    Uses the same bf16-operand / f32-accumulation matmul policy as the kernel
    so the comparison is apples-to-apples; BN math (biased batch variance,
    eps inside sqrt) matches nn.BatchNorm1d training mode."""
    h = jnp.dot(x.astype(jnp.bfloat16), w1.astype(jnp.bfloat16),
                preferred_element_type=jnp.float32) + b1.reshape(1, -1)
    mean = jnp.mean(h, axis=0, keepdims=True)
    var = jnp.mean(h * h, axis=0, keepdims=True) - mean * mean
    h = (h - mean) * jax.lax.rsqrt(var + BN_EPS)
    h = h * gamma.reshape(1, -1) + beta.reshape(1, -1)
    h = jnp.maximum(h, 0.0)
    return jnp.dot(h.astype(jnp.bfloat16), w2.astype(jnp.bfloat16),
                   preferred_element_type=jnp.float32) + b2.reshape(1, -1)


def init_params(key, in_dim, hidden_dim, out_dim):
    """Deterministic synthetic params mimicking PyTorch Linear init ranges.
    Linear weights are stored pre-transposed: (in, out), so x @ W applies."""
    k1, k2, k3, k4 = jax.random.split(key, 4)
    bound1 = 1.0 / jnp.sqrt(in_dim)
    bound2 = 1.0 / jnp.sqrt(hidden_dim)
    w1 = jax.random.uniform(k1, (in_dim, hidden_dim), jnp.float32, -bound1, bound1)
    b1 = jax.random.uniform(k2, (hidden_dim,), jnp.float32, -bound1, bound1)
    gamma = jnp.ones((hidden_dim,), jnp.float32)    # BatchNorm1d weight
    beta = jnp.zeros((hidden_dim,), jnp.float32)    # BatchNorm1d bias
    w2 = jax.random.uniform(k3, (hidden_dim, out_dim), jnp.float32, -bound2, bound2)
    b2 = jax.random.uniform(k4, (out_dim,), jnp.float32, -bound2, bound2)
    return w1, b1, gamma, beta, w2, b2


if __name__ == "__main__":
    # Small, lane-aligned shapes consistent with the module (defaults are
    # 1024 -> 512 -> 128; here a scaled-down but 128-multiple version so the
    # hidden-axis grid (2 steps at TH=256) is actually exercised).
    B, IN_DIM, HIDDEN_DIM, OUT_DIM = 64, 256, 512, 128

    key = jax.random.PRNGKey(0)
    kx, kp = jax.random.split(key)
    x = jax.random.normal(kx, (B, IN_DIM), jnp.float32)
    params = init_params(kp, IN_DIM, HIDDEN_DIM, OUT_DIM)

    out = projector_forward(x, *params)
    out = jax.block_until_ready(out)

    ref = projector_reference(x, *params)
    assert out.shape == (B, OUT_DIM)
    max_err = float(jnp.max(jnp.abs(out - ref)))
    assert jnp.allclose(out, ref, atol=1e-3, rtol=1e-3), (
        f"mismatch vs reference (max abs err {max_err})")

    print("KERNEL_OK")
</pallas_src>

<mosaic_0001>
module attributes {stable_mosaic.version = 11 : i64} {
  func.func @projector_kernel(%arg0: i32, %arg1: i32, %arg2: memref<64x256xbf16, #tpu.memory_space<vmem>>, %arg3: memref<256x256xbf16, #tpu.memory_space<vmem>>, %arg4: memref<1x256xf32, #tpu.memory_space<vmem>>, %arg5: memref<1x256xf32, #tpu.memory_space<vmem>>, %arg6: memref<1x256xf32, #tpu.memory_space<vmem>>, %arg7: memref<256x128xbf16, #tpu.memory_space<vmem>>, %arg8: memref<1x128xf32, #tpu.memory_space<vmem>>, %arg9: memref<64x128xf32, #tpu.memory_space<vmem>>, %arg10: memref<64x128xf32, #tpu.memory_space<vmem>>) attributes {dimension_semantics = [#tpu.dimension_semantics<parallel>, #tpu.dimension_semantics<arbitrary>], iteration_bounds = array<i64: 1, 2>, scalar_prefetch = 0 : i64, scratch_operands = 1 : i64, tpu.core_type = #tpu.core_type<tc>, window_params = [{pipeline_mode = #tpu.pipeline_mode<synchronous>, transform_indices = @transform_0, window_bounds = array<i64: 64, 256>}, {transform_indices = @transform_1, window_bounds = array<i64: 256, 256>}, {transform_indices = @transform_2, window_bounds = array<i64: 1, 256>}, {transform_indices = @transform_3, window_bounds = array<i64: 1, 256>}, {transform_indices = @transform_4, window_bounds = array<i64: 1, 256>}, {transform_indices = @transform_5, window_bounds = array<i64: 256, 128>}, {transform_indices = @transform_6, window_bounds = array<i64: 1, 128>}, {transform_indices = @transform_7, window_bounds = array<i64: 64, 128>}]} {
    %c0_i32 = arith.constant 0 : i32
    %0 = arith.cmpi eq, %arg1, %c0_i32 : i32
    %1 = arith.extui %0 : i1 to i32
    %c0_i32_0 = arith.constant 0 : i32
    %2 = arith.cmpi ne, %1, %c0_i32_0 : i32
    scf.if %2 {
      %cst_24 = arith.constant 0.000000e+00 : f32
      %43 = vector.broadcast %cst_24 : f32 to vector<64x128xf32>
      %c0_25 = arith.constant 0 : index
      %c0_26 = arith.constant 0 : index
      %44 = vector.load %arg10[%c0_25, %c0_26] : memref<64x128xf32, #tpu.memory_space<vmem>>, vector<64x128xf32>
      tpu.vector_store %arg10[%c0_25, %c0_26], %43 {strides = array<i32>} : memref<64x128xf32, #tpu.memory_space<vmem>>, vector<64x128xf32>,
    } else {
    }
    %c0 = arith.constant 0 : index
    %c0_1 = arith.constant 0 : index
    %3 = vector.load %arg2[%c0, %c0_1] : memref<64x256xbf16, #tpu.memory_space<vmem>>, vector<64x256xbf16>
    %c0_2 = arith.constant 0 : index
    %c0_3 = arith.constant 0 : index
    %4 = vector.load %arg3[%c0_2, %c0_3] : memref<256x256xbf16, #tpu.memory_space<vmem>>, vector<256x256xbf16>
    %cst = arith.constant dense<0.000000e+00> : vector<64x256xf32>
    %5 = tpu.matmul %3, %4, %cst {dimension_numbers = #tpu.dot_dimension_numbers<[1], [0], [0], [1], [0, 0, 1, 1], [], []>} : vector<64x256xbf16>, vector<256x256xbf16>, vector<64x256xf32> -> vector<64x256xf32>
    %c0_4 = arith.constant 0 : index
    %c0_5 = arith.constant 0 : index
    %6 = vector.load %arg4[%c0_4, %c0_5] : memref<1x256xf32, #tpu.memory_space<vmem>>, vector<1x256xf32>
    %7 = vector.broadcast %6 : vector<1x256xf32> to vector<64x256xf32>
    %8 = arith.addf %5, %7 : vector<64x256xf32>
    %cst_6 = arith.constant dense<0.000000e+00> : vector<256xf32>
    %9 = vector.multi_reduction <add>, %8, %cst_6 [0] : vector<64x256xf32> to vector<256xf32>
    %10 = vector.shape_cast %9 : vector<256xf32> to vector<1x256xf32>
    %11 = arith.mulf %8, %8 : vector<64x256xf32>
    %cst_7 = arith.constant dense<0.000000e+00> : vector<256xf32>
    %12 = vector.multi_reduction <add>, %11, %cst_7 [0] : vector<64x256xf32> to vector<256xf32>
    %13 = vector.shape_cast %12 : vector<256xf32> to vector<1x256xf32>
    %cst_8 = arith.constant 1.562500e-02 : f32
    %14 = vector.broadcast %cst_8 : f32 to vector<1x256xf32>
    %15 = arith.mulf %10, %14 : vector<1x256xf32>
    %cst_9 = arith.constant 1.562500e-02 : f32
    %16 = vector.broadcast %cst_9 : f32 to vector<1x256xf32>
    %17 = arith.mulf %13, %16 : vector<1x256xf32>
    %18 = arith.mulf %15, %15 : vector<1x256xf32>
    %19 = arith.subf %17, %18 : vector<1x256xf32>
    %c0_10 = arith.constant 0 : index
    %c0_11 = arith.constant 0 : index
    %20 = vector.load %arg5[%c0_10, %c0_11] : memref<1x256xf32, #tpu.memory_space<vmem>>, vector<1x256xf32>
    %cst_12 = arith.constant 9.99999974E-6 : f32
    %21 = vector.broadcast %cst_12 : f32 to vector<1x256xf32>
    %22 = arith.addf %19, %21 : vector<1x256xf32>
    %23 = math.rsqrt %22 : vector<1x256xf32>
    %24 = arith.mulf %20, %23 : vector<1x256xf32>
    %25 = vector.broadcast %15 : vector<1x256xf32> to vector<64x256xf32>
    %26 = arith.subf %8, %25 : vector<64x256xf32>
    %27 = vector.broadcast %24 : vector<1x256xf32> to vector<64x256xf32>
    %28 = arith.mulf %26, %27 : vector<64x256xf32>
    %c0_13 = arith.constant 0 : index
    %c0_14 = arith.constant 0 : index
    %29 = vector.load %arg6[%c0_13, %c0_14] : memref<1x256xf32, #tpu.memory_space<vmem>>, vector<1x256xf32>
    %30 = vector.broadcast %29 : vector<1x256xf32> to vector<64x256xf32>
    %31 = arith.addf %28, %30 : vector<64x256xf32>
    %cst_15 = arith.constant 0.000000e+00 : f32
    %32 = vector.broadcast %cst_15 : f32 to vector<64x256xf32>
    %33 = arith.maximumf %31, %32 : vector<64x256xf32>
    %c0_16 = arith.constant 0 : index
    %c0_17 = arith.constant 0 : index
    %34 = vector.load %arg10[%c0_16, %c0_17] : memref<64x128xf32, #tpu.memory_space<vmem>>, vector<64x128xf32>
    %35 = arith.truncf %33 : vector<64x256xf32> to vector<64x256xbf16>
    %c0_18 = arith.constant 0 : index
    %c0_19 = arith.constant 0 : index
    %36 = vector.load %arg7[%c0_18, %c0_19] : memref<256x128xbf16, #tpu.memory_space<vmem>>, vector<256x128xbf16>
    %cst_20 = arith.constant dense<0.000000e+00> : vector<64x128xf32>
    %37 = tpu.matmul %35, %36, %cst_20 {dimension_numbers = #tpu.dot_dimension_numbers<[1], [0], [0], [1], [0, 0, 1, 1], [], []>} : vector<64x256xbf16>, vector<256x128xbf16>, vector<64x128xf32> -> vector<64x128xf32>
    %38 = arith.addf %34, %37 : vector<64x128xf32>
    %c0_21 = arith.constant 0 : index
    %c0_22 = arith.constant 0 : index
    %39 = vector.load %arg10[%c0_21, %c0_22] : memref<64x128xf32, #tpu.memory_space<vmem>>, vector<64x128xf32>
    tpu.vector_store %arg10[%c0_21, %c0_22], %38 {strides = array<i32>} : memref<64x128xf32, #tpu.memory_space<vmem>>, vector<64x128xf32>,
    %c1_i32 = arith.constant 1 : i32
    %40 = arith.cmpi eq, %arg1, %c1_i32 : i32
    %41 = arith.extui %40 : i1 to i32
    %c0_i32_23 = arith.constant 0 : i32
    %42 = arith.cmpi ne, %41, %c0_i32_23 : i32
    scf.if %42 {
      %c0_24 = arith.constant 0 : index
      %c0_25 = arith.constant 0 : index
      %43 = vector.load %arg10[%c0_24, %c0_25] : memref<64x128xf32, #tpu.memory_space<vmem>>, vector<64x128xf32>
      %c0_26 = arith.constant 0 : index
      %c0_27 = arith.constant 0 : index
      %44 = vector.load %arg8[%c0_26, %c0_27] : memref<1x128xf32, #tpu.memory_space<vmem>>, vector<1x128xf32>
      %45 = vector.broadcast %44 : vector<1x128xf32> to vector<64x128xf32>
      %46 = arith.addf %43, %45 : vector<64x128xf32>
      %c0_28 = arith.constant 0 : index
      %c0_29 = arith.constant 0 : index
      %47 = vector.load %arg9[%c0_28, %c0_29] : memref<64x128xf32, #tpu.memory_space<vmem>>, vector<64x128xf32>
      tpu.vector_store %arg9[%c0_28, %c0_29], %46 {strides = array<i32>} : memref<64x128xf32, #tpu.memory_space<vmem>>, vector<64x128xf32>,
    } else {
    }
    return
  }
  func.func @transform_0(%arg0: i32, %arg1: i32) -> (i32, i32) {
    %c0_i32 = arith.constant 0 : i32
    %c0_i32_0 = arith.constant 0 : i32
    %c0_i32_1 = arith.constant 0 : i32
    return %c0_i32, %c0_i32_0 : i32, i32
  }
  func.func @transform_1(%arg0: i32, %arg1: i32) -> (i32, i32) {
    %c0_i32 = arith.constant 0 : i32
    %c0_i32_0 = arith.constant 0 : i32
    return %c0_i32, %arg1 : i32, i32
  }
  func.func @transform_2(%arg0: i32, %arg1: i32) -> (i32, i32) {
    %c0_i32 = arith.constant 0 : i32
    %c0_i32_0 = arith.constant 0 : i32
    return %c0_i32, %arg1 : i32, i32
  }
  func.func @transform_3(%arg0: i32, %arg1: i32) -> (i32, i32) {
    %c0_i32 = arith.constant 0 : i32
    %c0_i32_0 = arith.constant 0 : i32
    return %c0_i32, %arg1 : i32, i32
  }
  func.func @transform_4(%arg0: i32, %arg1: i32) -> (i32, i32) {
    %c0_i32 = arith.constant 0 : i32
    %c0_i32_0 = arith.constant 0 : i32
    return %c0_i32, %arg1 : i32, i32
  }
  func.func @transform_5(%arg0: i32, %arg1: i32) -> (i32, i32) {
    %c0_i32 = arith.constant 0 : i32
    return %arg1, %arg0 : i32, i32
  }
  func.func @transform_6(%arg0: i32, %arg1: i32) -> (i32, i32) {
    %c0_i32 = arith.constant 0 : i32
    %c0_i32_0 = arith.constant 0 : i32
    return %c0_i32, %arg0 : i32, i32
  }
  func.func @transform_7(%arg0: i32, %arg1: i32) -> (i32, i32) {
    %c0_i32 = arith.constant 0 : i32
    %c0_i32_0 = arith.constant 0 : i32
    return %c0_i32, %arg0 : i32, i32
  }
}

</mosaic_0001>

<llo_original>
// kernel: tpu_custom_call.1
$region0: #{tpu_custom_call.1}
  #allocation0 [shape = 'u32[]', space=smem, size = 0x4, offset = 0x4, fixed_abs, tag = 'smem constant byte address 0x4 - core index']
  #allocation1 [shape = 'u32[144,128]{1,0:T(1,128)}', space=vmem, size = 0x12000, scoped, tag = 'internal scratch']
  #allocation2 [shape = 'f32[64,128]{1,0:T(8,128)}', space=vmem, size = 0x8000, scoped, tag = 'scratch operand']
  %s0 = inlined_call_operand.hbm [shape: bf16[64,256], index: 0, kind: input, shape index: {}]
  %s1 = inlined_call_operand.hbm [shape: bf16[256,512], index: 1, kind: input, shape index: {}]
  %s2 = inlined_call_operand.hbm [shape: f32[1,512], index: 2, kind: input, shape index: {}]
  %s3 = inlined_call_operand.hbm [shape: f32[1,512], index: 3, kind: input, shape index: {}]
  %s4 = inlined_call_operand.hbm [shape: f32[1,512], index: 4, kind: input, shape index: {}]
  %s5 = inlined_call_operand.hbm [shape: bf16[512,128], index: 5, kind: input, shape index: {}]
  %s6 = inlined_call_operand.hbm [shape: f32[1,128], index: 6, kind: input, shape index: {}]
  %s7 = inlined_call_operand.hbm [shape: f32[64,128], index: 7, kind: output, shape index: {}]
  %s8 = sld [smem:[#allocation0]]
  $region97: #{tpu_custom_call.1} parent=0
    _
  %s10 = ssub.s32 1, %s8
  %s11 = scalar_select 0, %s10, %s8
  $region1: #{tpu_custom_call.1} parent=0
    #allocation3 [shape = 'u8[32768]{0}', space=vmem, size = 0x8000, scoped, tag = 'input window, operand 0, single buffered']
    #allocation4 [shape = 's32[2]{0}', space=sflag, size = 0x8, scoped, tag = 'scoped memory for tpu_custom_call.1']
    #allocation5 [shape = 's32[2]{0}', space=sflag, size = 0x8, scoped, tag = 'scoped memory for tpu_custom_call.1']
    #allocation6 [shape = 'u8[262144]{0}', space=vmem, size = 0x40000, scoped, tag = 'input window, operand 1']
    #allocation7 [shape = 's32[2]{0}', space=sflag, size = 0x8, scoped, tag = 'scoped memory for tpu_custom_call.1']
    #allocation8 [shape = 'u8[2048]{0}', space=vmem, size = 0x800, scoped, tag = 'input window, operand 2']
    #allocation9 [shape = 'u8[2048]{0}', space=vmem, size = 0x800, scoped, tag = 'input window, operand 3']
    #allocation10 [shape = 's32[2]{0}', space=sflag, size = 0x8, scoped, tag = 'scoped memory for tpu_custom_call.1']
    #allocation11 [shape = 'u8[2048]{0}', space=vmem, size = 0x800, scoped, tag = 'input window, operand 4']
    #allocation12 [shape = 'u8[131072]{0}', space=vmem, size = 0x20000, scoped, tag = 'input window, operand 5']
    #allocation13 [shape = 's32[2]{0}', space=sflag, size = 0x8, scoped, tag = 'scoped memory for tpu_custom_call.1']
    #allocation14 [shape = 'u8[512]{0}', space=vmem, size = 0x400, scoped, tag = 'input window, operand 6, single buffered']
    #allocation15 [shape = 'u8[32768]{0}', space=vmem, size = 0x8000, scoped, tag = 'output window, operand 0, single buffered']
    %12 = vsyncpa [#allocation4], 0
    %13 = vsyncpa [#allocation7], 0
    %s14 = scalar_lea.sflag [#allocation7], 1
    %15 = vsyncpa %s14, 0
    %16 = vsyncpa [#allocation10], 0
    %s17 = scalar_lea.sflag [#allocation10], 1
    %18 = vsyncpa %s17, 0
    %19 = vsyncpa [#allocation13], 0
    %s20 = scalar_lea.sflag [#allocation13], 1
    %21 = vsyncpa %s20, 0
    %22 = vsyncpa [#allocation5], 0
    loop: start=0, step=1, limit=4
    $region2: #{tpu_custom_call.1} parent=1 // loop_pre_header
      _
    $region3: #{tpu_custom_call.1} parent=1 // loop_header
      %s24 = sphi 0, %s28
      %p25 = scmp.ge.s32.totalorder %s24, 4
      %s31 = sphi 0, %s43
      %s32 = sphi 0, %s39
      %s33 = sphi 0, %s31
      %s34 = sphi 0, %s32
      %s35 = sphi 0, %s33
      %s36 = sphi 0, %s34
      %s44 = sphi 0, %s44
      %s46 = sphi 0, %s44
      %s47 = sphi 0, %s46
      %s61 = sphi 0, %s47
      %s67 = sphi 0, %s69
      %s70 = sphi 0, %s67
      %s71 = sphi 0, %s70
      %s87 = sphi 0, %s71
      %s93 = sphi 0, %s95
      %s96 = sphi 0, %s93
      %s97 = sphi 0, %s96
      %s113 = sphi 0, %s97
      %s119 = sphi 0, %s121
      %s122 = sphi 0, %s119
      %s123 = sphi 0, %s122
      %s139 = sphi 0, %s123
      %s145 = sphi 0, %s147
      %s148 = sphi 0, %s145
      %s149 = sphi 0, %s148
      %s165 = sphi 0, %s149
      %s173 = sphi 0, %s175
      %s176 = sphi 0, %s173
      %s177 = sphi 0, %s176
      %s193 = sphi 0, %s177
      %s199 = sphi 0, %s201
      %s202 = sphi 0, %s199
      %s203 = sphi 0, %s202
      %s219 = sphi 0, %s203
      %s225 = sphi 0, %s227
      %s228 = sphi 0, %s225
      %s229 = sphi 0, %s228
      %s245 = sphi 0, %s229
    $region4: #{tpu_custom_call.1} parent=1 // loop_header_branch
      %27 = sbr.rel (%p25) target = $region8
    $region5: #{tpu_custom_call.1} parent=1 // loop_body
      %s29 = ssub.s32 %s24, 1
      %s30 = ssub.s32 %s24, 2
      %s37 = sadd.s32 1, %s32
      %p38 = scmp.ge.s32.totalorder %s37, 2
      %s39 = scalar_select %p38, 0, %s37
      %s40 = sadd.s32 1, %s31
      %s41 = scalar_select %p38, %s40, %s31
      %p42 = scmp.ge.s32.totalorder %s41, 1
      %s43 = scalar_select %p42, 0, %s41
      %s45 = sadd.s32 %s44, 1
      %p48 = scmp.eq.s32.totalorder %s24, 1
      %p49 = scmp.ne.s32.totalorder %s44, %s46
      %p50 = scmp.eq.s32.totalorder %s24, 0
      %p51 = por %p49, %p50
      %p52 = scmp.ne.s32.totalorder %s44, %s46
      %p53 = scmp.eq.s32.totalorder %s29, 1
      %p54 = por %p52, %p53
      %p55 = scmp.ne.s32.totalorder %s46, %s47
      %p56 = scmp.eq.s32.totalorder %s29, 0
      %p57 = por %p55, %p56
      %p58 = scmp.ne.s32.totalorder %s46, %s47
      %p59 = scmp.eq.s32.totalorder %s30, 1
      %p60 = por %p58, %p59
      %p62 = scmp.ne.s32.totalorder %s47, %s61
      %p63 = scmp.eq.s32.totalorder %s30, 0
      %p64 = por %p62, %p63
      %s65 = ssub.s32 %s32, %s39
      %p66 = scmp.eq.s32.totalorder %s65, 0
      %s68 = sadd.s32 %s67, 1
      %s69 = scalar_select %p66, %s67, %s68
      %p72 = pneg %p66
      %p73 = scmp.eq.s32.totalorder %s24, 1
      %p74 = por %p72, %p73
      %p75 = scmp.ne.s32.totalorder %s67, %s70
      %p76 = scmp.eq.s32.totalorder %s24, 0
      %p77 = por %p75, %p76
      %p78 = scmp.ne.s32.totalorder %s67, %s70
      %p79 = scmp.eq.s32.totalorder %s29, 1
      %p80 = por %p78, %p79
      %p81 = scmp.ne.s32.totalorder %s70, %s71
      %p82 = scmp.eq.s32.totalorder %s29, 0
      %p83 = por %p81, %p82
      %p84 = scmp.ne.s32.totalorder %s70, %s71
      %p85 = scmp.eq.s32.totalorder %s30, 1
      %p86 = por %p84, %p85
      %p88 = scmp.ne.s32.totalorder %s71, %s87
      %p89 = scmp.eq.s32.totalorder %s30, 0
      %p90 = por %p88, %p89
      %s91 = ssub.s32 %s32, %s39
      %p92 = scmp.eq.s32.totalorder %s91, 0
      %s94 = sadd.s32 %s93, 1
      %s95 = scalar_select %p92, %s93, %s94
      %p98 = pneg %p92
      %p99 = scmp.eq.s32.totalorder %s24, 1
      %p100 = por %p98, %p99
      %p101 = scmp.ne.s32.totalorder %s93, %s96
      %p102 = scmp.eq.s32.totalorder %s24, 0
      %p103 = por %p101, %p102
      %p104 = scmp.ne.s32.totalorder %s93, %s96
      %p105 = scmp.eq.s32.totalorder %s29, 1
      %p106 = por %p104, %p105
      %p107 = scmp.ne.s32.totalorder %s96, %s97
      %p108 = scmp.eq.s32.totalorder %s29, 0
      %p109 = por %p107, %p108
      %p110 = scmp.ne.s32.totalorder %s96, %s97
      %p111 = scmp.eq.s32.totalorder %s30, 1
      %p112 = por %p110, %p111
      %p114 = scmp.ne.s32.totalorder %s97, %s113
      %p115 = scmp.eq.s32.totalorder %s30, 0
      %p116 = por %p114, %p115
      %s117 = ssub.s32 %s32, %s39
      %p118 = scmp.eq.s32.totalorder %s117, 0
      %s120 = sadd.s32 %s119, 1
      %s121 = scalar_select %p118, %s119, %s120
      %p124 = pneg %p118
      %p125 = scmp.eq.s32.totalorder %s24, 1
      %p126 = por %p124, %p125
      %p127 = scmp.ne.s32.totalorder %s119, %s122
      %p128 = scmp.eq.s32.totalorder %s24, 0
      %p129 = por %p127, %p128
      %p130 = scmp.ne.s32.totalorder %s119, %s122
      %p131 = scmp.eq.s32.totalorder %s29, 1
      %p132 = por %p130, %p131
      %p133 = scmp.ne.s32.totalorder %s122, %s123
      %p134 = scmp.eq.s32.totalorder %s29, 0
      %p135 = por %p133, %p134
      %p136 = scmp.ne.s32.totalorder %s122, %s123
      %p137 = scmp.eq.s32.totalorder %s30, 1
      %p138 = por %p136, %p137
      %p140 = scmp.ne.s32.totalorder %s123, %s139
      %p141 = scmp.eq.s32.totalorder %s30, 0
      %p142 = por %p140, %p141
      %s143 = ssub.s32 %s32, %s39
      %p144 = scmp.eq.s32.totalorder %s143, 0
      %s146 = sadd.s32 %s145, 1
      %s147 = scalar_select %p144, %s145, %s146
      %p150 = pneg %p144
      %p151 = scmp.eq.s32.totalorder %s24, 1
      %p152 = por %p150, %p151
      %p153 = scmp.ne.s32.totalorder %s145, %s148
      %p154 = scmp.eq.s32.totalorder %s24, 0
      %p155 = por %p153, %p154
      %p156 = scmp.ne.s32.totalorder %s145, %s148
      %p157 = scmp.eq.s32.totalorder %s29, 1
      %p158 = por %p156, %p157
      %p159 = scmp.ne.s32.totalorder %s148, %s149
      %p160 = scmp.eq.s32.totalorder %s29, 0
      %p161 = por %p159, %p160
      %p162 = scmp.ne.s32.totalorder %s148, %s149
      %p163 = scmp.eq.s32.totalorder %s30, 1
      %p164 = por %p162, %p163
      %p166 = scmp.ne.s32.totalorder %s149, %s165
      %p167 = scmp.eq.s32.totalorder %s30, 0
      %p168 = por %p166, %p167
      %s169 = ssub.s32 %s32, %s39
      %s170 = ssub.s32 %s31, %s43
      %s171 = sor.u32 %s169, %s170
      %p172 = scmp.eq.s32.totalorder %s171, 0
      %s174 = sadd.s32 %s173, 1
      %s175 = scalar_select %p172, %s173, %s174
      %p178 = pneg %p172
      %p179 = scmp.eq.s32.totalorder %s24, 1
      %p180 = por %p178, %p179
      %p181 = scmp.ne.s32.totalorder %s173, %s176
      %p182 = scmp.eq.s32.totalorder %s24, 0
      %p183 = por %p181, %p182
      %p184 = scmp.ne.s32.totalorder %s173, %s176
      %p185 = scmp.eq.s32.totalorder %s29, 1
      %p186 = por %p184, %p185
      %p187 = scmp.ne.s32.totalorder %s176, %s177
      %p188 = scmp.eq.s32.totalorder %s29, 0
      %p189 = por %p187, %p188
      %p190 = scmp.ne.s32.totalorder %s176, %s177
      %p191 = scmp.eq.s32.totalorder %s30, 1
      %p192 = por %p190, %p191
      %p194 = scmp.ne.s32.totalorder %s177, %s193
      %p195 = scmp.eq.s32.totalorder %s30, 0
      %p196 = por %p194, %p195
      %s197 = ssub.s32 %s31, %s43
      %p198 = scmp.eq.s32.totalorder %s197, 0
      %s200 = sadd.s32 %s199, 1
      %s201 = scalar_select %p198, %s199, %s200
      %p204 = pneg %p198
      %p205 = scmp.eq.s32.totalorder %s24, 1
      %p206 = por %p204, %p205
      %p207 = scmp.ne.s32.totalorder %s199, %s202
      %p208 = scmp.eq.s32.totalorder %s24, 0
      %p209 = por %p207, %p208
      %p210 = scmp.ne.s32.totalorder %s199, %s202
      %p211 = scmp.eq.s32.totalorder %s29, 1
      %p212 = por %p210, %p211
      %p213 = scmp.ne.s32.totalorder %s202, %s203
      %p214 = scmp.eq.s32.totalorder %s29, 0
      %p215 = por %p213, %p214
      %p216 = scmp.ne.s32.totalorder %s202, %s203
      %p217 = scmp.eq.s32.totalorder %s30, 1
      %p218 = por %p216, %p217
      %p220 = scmp.ne.s32.totalorder %s203, %s219
      %p221 = scmp.eq.s32.totalorder %s30, 0
      %p222 = por %p220, %p221
      %s223 = ssub.s32 %s31, %s43
      %p224 = scmp.eq.s32.totalorder %s223, 0
      %s226 = sadd.s32 %s225, 1
      %s227 = scalar_select %p224, %s225, %s226
      %p230 = pneg %p224
      %p231 = scmp.eq.s32.totalorder %s24, 1
      %p232 = por %p230, %p231
      %p233 = scmp.ne.s32.totalorder %s225, %s228
      %p234 = scmp.eq.s32.totalorder %s24, 0
      %p235 = por %p233, %p234
      %p236 = scmp.ne.s32.totalorder %s225, %s228
      %p237 = scmp.eq.s32.totalorder %s29, 1
      %p238 = por %p236, %p237
      %p239 = scmp.ne.s32.totalorder %s228, %s229
      %p240 = scmp.eq.s32.totalorder %s29, 0
      %p241 = por %p239, %p240
      %p242 = scmp.ne.s32.totalorder %s228, %s229
      %p243 = scmp.eq.s32.totalorder %s30, 1
      %p244 = por %p242, %p243
      %p246 = scmp.ne.s32.totalorder %s229, %s245
      %p247 = scmp.eq.s32.totalorder %s30, 0
      %p248 = por %p246, %p247
      %p249 = scmp.le.s32.totalorder 1, %s24
      %p250 = scmp.lt.s32.totalorder %s24, 3
      %p251 = pnand %p249, %p250
      %p252 = pneg %p251
      // Predicated region
      $region9: #{tpu_custom_call.1} parent=5 // pred_check
        _
      $region10: #{tpu_custom_call.1} parent=5 // pred_check_branch
        %254 = sbr.rel (%p251) target = $region12
      $region11: #{tpu_custom_call.1} parent=5 // pred_region
        %s255 = ssub.s32 %s24, 1
        // Predicated region
        $region13: #{tpu_custom_call.1} parent=11 // pred_check
          %p256 = pneg %p57
        $region14: #{tpu_custom_call.1} parent=11 // pred_check_branch
          %258 = sbr.rel (%p256) target = $region16
        $region15: #{tpu_custom_call.1} parent=11 // pred_region
          %s260 = ssub.s32 1024, 1024
          %261 = vsyncadd [#allocation4], %s260
          %s262 = sshll.u32 [#allocation3], 4
          %s263 = int_to_ptr.vmem [resolvable:$true] %s262
          %268 = dma.hbm_to_vmem [thread:$0]  %s0, 1024, %s263, [#allocation4], 128, 128, 8
        $region16: #{tpu_custom_call.1} parent=11 // pred_fallthru
          _
        // Predicated region
        $region17: #{tpu_custom_call.1} parent=11 // pred_check
          %p269 = pneg %p215
        $region18: #{tpu_custom_call.1} parent=11 // pred_check_branch
          %271 = sbr.rel (%p269) target = $region20
        $region19: #{tpu_custom_call.1} parent=11 // pred_region
          %s273 = ssub.s32 16, 16
          %274 = vsyncadd [#allocation13], %s273
          %s275 = smul.addr %s33, 16
          %s276 = scalar_lea.hbm %s6, %s275
          %s278 = sshll.u32 [#allocation14], 4
          %s279 = int_to_ptr.vmem [resolvable:$true] %s278
          %281 = dma.hbm_to_vmem [thread:$0]  %s276, 16, %s279, [#allocation13]
        $region20: #{tpu_custom_call.1} parent=11 // pred_fallthru
          _
      $region12: #{tpu_custom_call.1} parent=5 // pred_fallthru
        _
      %p282 = scmp.lt.s32.totalorder %s24, 2
      // Predicated region
      $region21: #{tpu_custom_call.1} parent=5 // pred_check
        %p283 = pneg %p282
      $region22: #{tpu_custom_call.1} parent=5 // pred_check_branch
        %285 = sbr.rel (%p283) target = $region24
      $region23: #{tpu_custom_call.1} parent=5 // pred_region
        // Predicated region
        $region25: #{tpu_custom_call.1} parent=23 // pred_check
          %p286 = pneg %p77
        $region26: #{tpu_custom_call.1} parent=23 // pred_check_branch
          %288 = sbr.rel (%p286) target = $region28
        $region27: #{tpu_custom_call.1} parent=23 // pred_region
          %s289 = sand.u32 %s24, 1
          %s290 = scalar_lea.sflag [#allocation7], %s289
          %s291 = sand.u32 %s67, 1
          %s292 = smul.addr %s291, 256
          %s293 = scalar_lea.vmem [#allocation6], %s292
          %s294 = smul.u32 2, %s32
          %s296 = ssub.s32 4096, 4096
          %297 = vsyncadd %s290, %s296
          %s298 = smul.addr %s294, 64
          %s299 = scalar_lea.hbm %s1, %s298
          %s300 = sshll.u32 %s293, 4
          %s301 = int_to_ptr.vmem [resolvable:$true] %s300
          %306 = dma.hbm_to_vmem [thread:$0]  %s299, 4096, %s301, %s290, 256, 128, 8
        $region28: #{tpu_custom_call.1} parent=23 // pred_fallthru
          _
        // Predicated region
        $region29: #{tpu_custom_call.1} parent=23 // pred_check
          %p307 = pneg %p103
        $region30: #{tpu_custom_call.1} parent=23 // pred_check_branch
          %309 = sbr.rel (%p307) target = $region32
        $region31: #{tpu_custom_call.1} parent=23 // pred_region
          %s310 = sand.u32 %s24, 1
          %s311 = scalar_lea.sflag [#allocation7], %s310
          %s312 = sand.u32 %s93, 1
          %s313 = smul.addr %s312, 2
          %s314 = scalar_lea.vmem [#allocation8], %s313
          %s315 = smul.u32 2, %s32
          %s317 = ssub.s32 32, 32
          %318 = vsyncadd %s311, %s317
          %s319 = smul.addr %s315, 16
          %s320 = scalar_lea.hbm %s2, %s319
          %s322 = sshll.u32 %s314, 4
          %s323 = int_to_ptr.vmem [resolvable:$true] %s322
          %325 = dma.hbm_to_vmem [thread:$0]  %s320, 32, %s323, %s311
        $region32: #{tpu_custom_call.1} parent=23 // pred_fallthru
          _
        // Predicated region
        $region33: #{tpu_custom_call.1} parent=23 // pred_check
          %p326 = pneg %p129
        $region34: #{tpu_custom_call.1} parent=23 // pred_check_branch
          %328 = sbr.rel (%p326) target = $region36
        $region35: #{tpu_custom_call.1} parent=23 // pred_region
          %s329 = sand.u32 %s24, 1
          %s330 = scalar_lea.sflag [#allocation10], %s329
          %s331 = sand.u32 %s119, 1
          %s332 = smul.addr %s331, 2
          %s333 = scalar_lea.vmem [#allocation9], %s332
          %s334 = smul.u32 2, %s32
          %s336 = ssub.s32 32, 32
          %337 = vsyncadd %s330, %s336
          %s338 = smul.addr %s334, 16
          %s339 = scalar_lea.hbm %s3, %s338
          %s341 = sshll.u32 %s333, 4
          %s342 = int_to_ptr.vmem [resolvable:$true] %s341
          %344 = dma.hbm_to_vmem [thread:$0]  %s339, 32, %s342, %s330
        $region36: #{tpu_custom_call.1} parent=23 // pred_fallthru
          _
        // Predicated region
        $region37: #{tpu_custom_call.1} parent=23 // pred_check
          %p345 = pneg %p155
        $region38: #{tpu_custom_call.1} parent=23 // pred_check_branch
          %347 = sbr.rel (%p345) target = $region40
        $region39: #{tpu_custom_call.1} parent=23 // pred_region
          %s348 = sand.u32 %s24, 1
          %s349 = scalar_lea.sflag [#allocation10], %s348
          %s350 = sand.u32 %s145, 1
          %s351 = smul.addr %s350, 2
          %s352 = scalar_lea.vmem [#allocation11], %s351
          %s353 = smul.u32 2, %s32
          %s355 = ssub.s32 32, 32
          %356 = vsyncadd %s349, %s355
          %s357 = smul.addr %s353, 16
          %s358 = scalar_lea.hbm %s4, %s357
          %s360 = sshll.u32 %s352, 4
          %s361 = int_to_ptr.vmem [resolvable:$true] %s360
          %363 = dma.hbm_to_vmem [thread:$0]  %s358, 32, %s361, %s349
        $region40: #{tpu_custom_call.1} parent=23 // pred_fallthru
          _
        // Predicated region
        $region41: #{tpu_custom_call.1} parent=23 // pred_check
          %p364 = pneg %p183
        $region42: #{tpu_custom_call.1} parent=23 // pred_check_branch
          %366 = sbr.rel (%p364) target = $region44
        $region43: #{tpu_custom_call.1} parent=23 // pred_region
          %s367 = sand.u32 %s24, 1
          %s368 = scalar_lea.sflag [#allocation13], %s367
          %s369 = sand.u32 %s173, 1
          %s370 = smul.addr %s369, 128
          %s371 = scalar_lea.vmem [#allocation12], %s370
          %s372 = smul.u32 32, %s32
          %s374 = ssub.s32 2048, 2048
          %375 = vsyncadd %s368, %s374
          %s376 = sadd.s32 %s31, %s372
          %s377 = smul.addr %s376, 64
          %s378 = scalar_lea.hbm %s5, %s377
          %s379 = sshll.u32 %s371, 4
          %s380 = int_to_ptr.vmem [resolvable:$true] %s379
          %385 = dma.hbm_to_vmem [thread:$0]  %s378, 2048, %s380, %s368, 64, 64, 4
        $region44: #{tpu_custom_call.1} parent=23 // pred_fallthru
          _
      $region24: #{tpu_custom_call.1} parent=5 // pred_fallthru
        _
      %p386 = scmp.le.s32.totalorder 1, %s24
      %p387 = scmp.lt.s32.totalorder %s24, 3
      %p388 = pnand %p386, %p387
      %p389 = pneg %p388
      // Predicated region
      $region45: #{tpu_custom_call.1} parent=5 // pred_check
        _
      $region46: #{tpu_custom_call.1} parent=5 // pred_check_branch
        %391 = sbr.rel (%p388) target = $region48
      $region47: #{tpu_custom_call.1} parent=5 // pred_region
        %s392 = ssub.s32 %s24, 1
        // Predicated region
        $region49: #{tpu_custom_call.1} parent=47 // pred_check
          %p393 = pneg %p57
        $region50: #{tpu_custom_call.1} parent=47 // pred_check_branch
          %395 = sbr.rel (%p393) target = $region52
        $region51: #{tpu_custom_call.1} parent=47 // pred_region
          %396 = dma.done [#allocation4], 1024
        $region52: #{tpu_custom_call.1} parent=47 // pred_fallthru
          _
        %s397 = sand.u32 %s29, 1
        %s398 = scalar_lea.sflag [#allocation7], %s397
        %s399 = sand.u32 %s70, 1
        %s400 = smul.addr %s399, 256
        %s401 = scalar_lea.vmem [#allocation6], %s400
        // Predicated region
        $region53: #{tpu_custom_call.1} parent=47 // pred_check
          %p402 = pneg %p83
        $region54: #{tpu_custom_call.1} parent=47 // pred_check_branch
          %404 = sbr.rel (%p402) target = $region56
        $region55: #{tpu_custom_call.1} parent=47 // pred_region
          %405 = dma.done %s398, 4096
        $region56: #{tpu_custom_call.1} parent=47 // pred_fallthru
          _
        %s406 = sand.u32 %s29, 1
        %s407 = scalar_lea.sflag [#allocation7], %s406
        %s408 = sand.u32 %s96, 1
        %s409 = smul.addr %s408, 2
        %s410 = scalar_lea.vmem [#allocation8], %s409
        // Predicated region
        $region57: #{tpu_custom_call.1} parent=47 // pred_check
          %p411 = pneg %p109
        $region58: #{tpu_custom_call.1} parent=47 // pred_check_branch
          %413 = sbr.rel (%p411) target = $region60
        $region59: #{tpu_custom_call.1} parent=47 // pred_region
          %414 = dma.done %s407, 32
        $region60: #{tpu_custom_call.1} parent=47 // pred_fallthru
          _
        %s415 = sand.u32 %s29, 1
        %s416 = scalar_lea.sflag [#allocation10], %s415
        %s417 = sand.u32 %s122, 1
        %s418 = smul.addr %s417, 2
        %s419 = scalar_lea.vmem [#allocation9], %s418
        // Predicated region
        $region61: #{tpu_custom_call.1} parent=47 // pred_check
          %p420 = pneg %p135
        $region62: #{tpu_custom_call.1} parent=47 // pred_check_branch
          %422 = sbr.rel (%p420) target = $region64
        $region63: #{tpu_custom_call.1} parent=47 // pred_region
          %423 = dma.done %s416, 32
        $region64: #{tpu_custom_call.1} parent=47 // pred_fallthru
          _
        %s424 = sand.u32 %s29, 1
        %s425 = scalar_lea.sflag [#allocation10], %s424
        %s426 = sand.u32 %s148, 1
        %s427 = smul.addr %s426, 2
        %s428 = scalar_lea.vmem [#allocation11], %s427
        // Predicated region
        $region65: #{tpu_custom_call.1} parent=47 // pred_check
          %p429 = pneg %p161
        $region66: #{tpu_custom_call.1} parent=47 // pred_check_branch
          %431 = sbr.rel (%p429) target = $region68
        $region67: #{tpu_custom_call.1} parent=47 // pred_region
          %432 = dma.done %s425, 32
        $region68: #{tpu_custom_call.1} parent=47 // pred_fallthru
          _
        %s433 = sand.u32 %s29, 1
        %s434 = scalar_lea.sflag [#allocation13], %s433
        %s435 = sand.u32 %s176, 1
        %s436 = smul.addr %s435, 128
        %s437 = scalar_lea.vmem [#allocation12], %s436
        // Predicated region
        $region69: #{tpu_custom_call.1} parent=47 // pred_check
          %p438 = pneg %p189
        $region70: #{tpu_custom_call.1} parent=47 // pred_check_branch
          %440 = sbr.rel (%p438) target = $region72
        $region71: #{tpu_custom_call.1} parent=47 // pred_region
          %441 = dma.done %s434, 2048
        $region72: #{tpu_custom_call.1} parent=47 // pred_fallthru
          _
        // Predicated region
        $region73: #{tpu_custom_call.1} parent=47 // pred_check
          %p442 = pneg %p215
        $region74: #{tpu_custom_call.1} parent=47 // pred_check_branch
          %444 = sbr.rel (%p442) target = $region76
        $region75: #{tpu_custom_call.1} parent=47 // pred_region
          %445 = dma.done [#allocation13], 16
        $region76: #{tpu_custom_call.1} parent=47 // pred_fallthru
          _
        %p446 = pneg %p57
        %p447 = pneg %p54
        %s448 = sand.u32 %s29, 1
        %s449 = scalar_lea.sflag [#allocation7], %s448
        %s450 = sand.u32 %s70, 1
        %s451 = smul.addr %s450, 256
        %s452 = scalar_lea.vmem [#allocation6], %s451
        %p453 = pneg %p83
        %p454 = pneg %p80
        %s455 = sand.u32 %s29, 1
        %s456 = scalar_lea.sflag [#allocation7], %s455
        %s457 = sand.u32 %s96, 1
        %s458 = smul.addr %s457, 2
        %s459 = scalar_lea.vmem [#allocation8], %s458
        %p460 = pneg %p109
        %p461 = pneg %p106
        %s462 = sand.u32 %s29, 1
        %s463 = scalar_lea.sflag [#allocation10], %s462
        %s464 = sand.u32 %s122, 1
        %s465 = smul.addr %s464, 2
        %s466 = scalar_lea.vmem [#allocation9], %s465
        %p467 = pneg %p135
        %p468 = pneg %p132
        %s469 = sand.u32 %s29, 1
        %s470 = scalar_lea.sflag [#allocation10], %s469
        %s471 = sand.u32 %s148, 1
        %s472 = smul.addr %s471, 2
        %s473 = scalar_lea.vmem [#allocation11], %s472
        %p474 = pneg %p161
        %p475 = pneg %p158
        %s476 = sand.u32 %s29, 1
        %s477 = scalar_lea.sflag [#allocation13], %s476
        %s478 = sand.u32 %s176, 1
        %s479 = smul.addr %s478, 128
        %s480 = scalar_lea.vmem [#allocation12], %s479
        %p481 = pneg %p189
        %p482 = pneg %p186
        %p483 = pneg %p215
        %p484 = pneg %p212
        %p485 = pneg %p241
        %p486 = pneg %p238
        %s487 = smul.u32 2, %s34
        %s488 = smul.u32 2, %s34
        %s489 = smul.u32 2, %s34
        %s490 = smul.u32 2, %s34
        %s491 = smul.u32 32, %s34
        %p493 = scmp.eq.s32.totalorder %s34, 0
        // Predicated region
        $region77: #{tpu_custom_call.1} parent=47 // pred_check
          %p494 = pneg %p493
        $region78: #{tpu_custom_call.1} parent=47 // pred_check_branch
          %496 = sbr.rel (%p494) target = $region80
        $region79: #{tpu_custom_call.1} parent=47 // pred_region
          %497 = vst [vmem:[#allocation2] sm:$0xff] 0.0
          %498 = vst [vmem:[#allocation2 + $0x8] sm:$0xff] 0.0
          %499 = vst [vmem:[#allocation2 + $0x10] sm:$0xff] 0.0
          %500 = vst [vmem:[#allocation2 + $0x18] sm:$0xff] 0.0
          %501 = vst [vmem:[#allocation2 + $0x20] sm:$0xff] 0.0
          %502 = vst [vmem:[#allocation2 + $0x28] sm:$0xff] 0.0
          %503 = vst [vmem:[#allocation2 + $0x30] sm:$0xff] 0.0
          %504 = vst [vmem:[#allocation2 + $0x38] sm:$0xff] 0.0
        $region80: #{tpu_custom_call.1} parent=47 // pred_fallthru
          _
        %v505 = vld [vmem:[#allocation3] sm:$0xff]
        %v506 = vld [vmem:[#allocation3 + $0x8] sm:$0xff]
        %v507 = vld [vmem:[#allocation3 + $0x10] sm:$0xff]
        %v508 = vld [vmem:[#allocation3 + $0x18] sm:$0xff]
        %v509 = vld [vmem:[#allocation3 + $0x20] sm:$0xff]
        %v510 = vld [vmem:[#allocation3 + $0x28] sm:$0xff]
        %v511 = vld [vmem:[#allocation3 + $0x30] sm:$0xff]
        %v512 = vld [vmem:[#allocation3 + $0x38] sm:$0xff]
        %v513 = vld [vmem:[%s401] sm:$0xff]
        %v514 = vld [vmem:[%s401 + $0x8] sm:$0xff]
        %v515 = vld [vmem:[%s401 + $0x10] sm:$0xff]
        %v516 = vld [vmem:[%s401 + $0x18] sm:$0xff]
        %v517 = vld [vmem:[%s401 + $0x20] sm:$0xff]
        %v518 = vld [vmem:[%s401 + $0x28] sm:$0xff]
        %v519 = vld [vmem:[%s401 + $0x30] sm:$0xff]
        %v520 = vld [vmem:[%s401 + $0x38] sm:$0xff]
        %v521 = vld [vmem:[%s401 + $0x40] sm:$0xff]
        %v522 = vld [vmem:[%s401 + $0x48] sm:$0xff]
        %v523 = vld [vmem:[%s401 + $0x50] sm:$0xff]
        %v524 = vld [vmem:[%s401 + $0x58] sm:$0xff]
        %v525 = vld [vmem:[%s401 + $0x60] sm:$0xff]
        %v526 = vld [vmem:[%s401 + $0x68] sm:$0xff]
        %v527 = vld [vmem:[%s401 + $0x70] sm:$0xff]
        %v528 = vld [vmem:[%s401 + $0x78] sm:$0xff]
        %v529 = vld [vmem:[%s401 + $0x80] sm:$0xff]
        %v530 = vld [vmem:[%s401 + $0x88] sm:$0xff]
        %v531 = vld [vmem:[%s401 + $0x90] sm:$0xff]
        %v532 = vld [vmem:[%s401 + $0x98] sm:$0xff]
        %v533 = vld [vmem:[%s401 + $0xa0] sm:$0xff]
        %v534 = vld [vmem:[%s401 + $0xa8] sm:$0xff]
        %v535 = vld [vmem:[%s401 + $0xb0] sm:$0xff]
        %v536 = vld [vmem:[%s401 + $0xb8] sm:$0xff]
        %v537 = vld [vmem:[%s401 + $0xc0] sm:$0xff]
        %v538 = vld [vmem:[%s401 + $0xc8] sm:$0xff]
        %v539 = vld [vmem:[%s401 + $0xd0] sm:$0xff]
        %v540 = vld [vmem:[%s401 + $0xd8] sm:$0xff]
        %v541 = vld [vmem:[%s401 + $0xe0] sm:$0xff]
        %v542 = vld [vmem:[%s401 + $0xe8] sm:$0xff]
        %v543 = vld [vmem:[%s401 + $0xf0] sm:$0xff]
        %v544 = vld [vmem:[%s401 + $0xf8] sm:$0xff]
        %v545 = vld [vmem:[%s410] sm:$0x3]
        %v547 = vlaneseq
        %v548 = vshrl.u32 %v547, 7
        %v549 = vsub.s32 0, %v548
        %v550 = vrot.slane %v545, %v549
        %v551 = vlaneseq
        %v552 = vshrl.u32 %v551, 7
        %v553 = vsub.s32 1, %v552
        %v554 = vrot.slane %v545, %v553
        %v565 = vunpack.c.l.b16 %v505
        %v566 = vunpack.c.h.b16 %v505
        %v567 = vunpack.c.l.b16 %v506
        %v568 = vunpack.c.h.b16 %v506
        %v569 = vunpack.c.l.b16 %v507
        %v570 = vunpack.c.h.b16 %v507
        %v571 = vunpack.c.l.b16 %v508
        %v572 = vunpack.c.h.b16 %v508
        %v573 = vunpack.c.l.b16 %v509
        %v574 = vunpack.c.h.b16 %v509
        %v575 = vunpack.c.l.b16 %v510
        %v576 = vunpack.c.h.b16 %v510
        %v577 = vunpack.c.l.b16 %v511
        %v578 = vunpack.c.h.b16 %v511
        %v579 = vunpack.c.l.b16 %v512
        %v580 = vunpack.c.h.b16 %v512
        %v581 = vpack.c.b16 %v567, %v565
        %v582 = vpack.c.b16 %v568, %v566
        %v583 = vpack.c.b16 %v571, %v569
        %v584 = vpack.c.b16 %v572, %v570
        %v585 = vpack.c.b16 %v575, %v573
        %v586 = vpack.c.b16 %v576, %v574
        %v587 = vpack.c.b16 %v579, %v577
        %v588 = vpack.c.b16 %v580, %v578
        %v629 = vunpack.c.l.b16 %v513
        %v630 = vunpack.c.h.b16 %v513
        %v631 = vunpack.c.l.b16 %v514
        %v632 = vunpack.c.h.b16 %v514
        %v633 = vunpack.c.l.b16 %v515
        %v634 = vunpack.c.h.b16 %v515
        %v635 = vunpack.c.l.b16 %v516
        %v636 = vunpack.c.h.b16 %v516
        %v637 = vunpack.c.l.b16 %v517
        %v638 = vunpack.c.h.b16 %v517
        %v639 = vunpack.c.l.b16 %v518
        %v640 = vunpack.c.h.b16 %v518
        %v641 = vunpack.c.l.b16 %v519
        %v642 = vunpack.c.h.b16 %v519
        %v643 = vunpack.c.l.b16 %v520
        %v644 = vunpack.c.h.b16 %v520
        %v645 = vunpack.c.l.b16 %v521
        %v646 = vunpack.c.h.b16 %v521
        %v647 = vunpack.c.l.b16 %v522
        %v648 = vunpack.c.h.b16 %v522
        %v649 = vunpack.c.l.b16 %v523
        %v650 = vunpack.c.h.b16 %v523
        %v651 = vunpack.c.l.b16 %v524
        %v652 = vunpack.c.h.b16 %v524
        %v653 = vunpack.c.l.b16 %v525
        %v654 = vunpack.c.h.b16 %v525
        %v655 = vunpack.c.l.b16 %v526
        %v656 = vunpack.c.h.b16 %v526
        %v657 = vunpack.c.l.b16 %v527
        %v658 = vunpack.c.h.b16 %v527
        %v659 = vunpack.c.l.b16 %v528
        %v660 = vunpack.c.h.b16 %v528
        %v661 = vunpack.c.l.b16 %v529
        %v662 = vunpack.c.h.b16 %v529
        %v663 = vunpack.c.l.b16 %v530
        %v664 = vunpack.c.h.b16 %v530
        %v665 = vunpack.c.l.b16 %v531
        %v666 = vunpack.c.h.b16 %v531
        %v667 = vunpack.c.l.b16 %v532
        %v668 = vunpack.c.h.b16 %v532
        %v669 = vunpack.c.l.b16 %v533
        %v670 = vunpack.c.h.b16 %v533
        %v671 = vunpack.c.l.b16 %v534
        %v672 = vunpack.c.h.b16 %v534
        %v673 = vunpack.c.l.b16 %v535
        %v674 = vunpack.c.h.b16 %v535
        %v675 = vunpack.c.l.b16 %v536
        %v676 = vunpack.c.h.b16 %v536
        %v677 = vunpack.c.l.b16 %v537
        %v678 = vunpack.c.h.b16 %v537
        %v679 = vunpack.c.l.b16 %v538
        %v680 = vunpack.c.h.b16 %v538
        %v681 = vunpack.c.l.b16 %v539
        %v682 = vunpack.c.h.b16 %v539
        %v683 = vunpack.c.l.b16 %v540
        %v684 = vunpack.c.h.b16 %v540
        %v685 = vunpack.c.l.b16 %v541
        %v686 = vunpack.c.h.b16 %v541
        %v687 = vunpack.c.l.b16 %v542
        %v688 = vunpack.c.h.b16 %v542
        %v689 = vunpack.c.l.b16 %v543
        %v690 = vunpack.c.h.b16 %v543
        %v691 = vunpack.c.l.b16 %v544
        %v692 = vunpack.c.h.b16 %v544
        %v693 = vpack.c.b16 %v631, %v629
        %v694 = vpack.c.b16 %v632, %v630
        %v695 = vpack.c.b16 %v635, %v633
        %v696 = vpack.c.b16 %v636, %v634
        %v697 = vpack.c.b16 %v639, %v637
        %v698 = vpack.c.b16 %v640, %v638
        %v699 = vpack.c.b16 %v643, %v641
        %v700 = vpack.c.b16 %v644, %v642
        %v701 = vpack.c.b16 %v647, %v645
        %v702 = vpack.c.b16 %v648, %v646
        %v703 = vpack.c.b16 %v651, %v649
        %v704 = vpack.c.b16 %v652, %v650
        %v705 = vpack.c.b16 %v655, %v653
        %v706 = vpack.c.b16 %v656, %v654
        %v707 = vpack.c.b16 %v659, %v657
        %v708 = vpack.c.b16 %v660, %v658
        %v709 = vpack.c.b16 %v663, %v661
        %v710 = vpack.c.b16 %v664, %v662
        %v711 = vpack.c.b16 %v667, %v665
        %v712 = vpack.c.b16 %v668, %v666
        %v713 = vpack.c.b16 %v671, %v669
        %v714 = vpack.c.b16 %v672, %v670
        %v715 = vpack.c.b16 %v675, %v673
        %v716 = vpack.c.b16 %v676, %v674
        %v717 = vpack.c.b16 %v679, %v677
        %v718 = vpack.c.b16 %v680, %v678
        %v719 = vpack.c.b16 %v683, %v681
        %v720 = vpack.c.b16 %v684, %v682
        %v721 = vpack.c.b16 %v687, %v685
        %v722 = vpack.c.b16 %v688, %v686
        %v723 = vpack.c.b16 %v691, %v689
        %v724 = vpack.c.b16 %v692, %v690
        %757 = vmatprep.subr.bf16.mxu0 %v694
        %758 = vmatpush1.bf16.msra.mxu0 %v693
        %759 = vmatprep.subr.bf16.mxu0 %v696
        %760 = vmatpush1.bf16.msra.mxu0 %v695
        %761 = vmatprep.subr.bf16.mxu0 %v698
        %762 = vmatpush1.bf16.msra.mxu0 %v697
        %763 = vmatprep.subr.bf16.mxu0 %v700
        %764 = vmatpush1.bf16.msra.mxu0 %v699
        %765 = vmatprep.subr.bf16.mxu0 %v702
        %766 = vmatpush1.bf16.msra.mxu0 %v701
        %767 = vmatprep.subr.bf16.mxu0 %v704
        %768 = vmatpush1.bf16.msra.mxu0 %v703
        %769 = vmatprep.subr.bf16.mxu0 %v706
        %770 = vmatpush1.bf16.msra.mxu0 %v705
        %771 = vmatprep.subr.bf16.mxu0 %v708
        %772 = vmatpush1.bf16.msra.mxu0 %v707
        %773 = vmatprep.subr.bf16.mxu0 %v710
        %774 = vmatpush1.bf16.msra.mxu0 %v709
        %775 = vmatprep.subr.bf16.mxu0 %v712
        %776 = vmatpush1.bf16.msra.mxu0 %v711
        %777 = vmatprep.subr.bf16.mxu0 %v714
        %778 = vmatpush1.bf16.msra.mxu0 %v713
        %779 = vmatprep.subr.bf16.mxu0 %v716
        %780 = vmatpush1.bf16.msra.mxu0 %v715
        %781 = vmatprep.subr.bf16.mxu0 %v718
        %782 = vmatpush1.bf16.msra.mxu0 %v717
        %783 = vmatprep.subr.bf16.mxu0 %v720
        %784 = vmatpush1.bf16.msra.mxu0 %v719
        %785 = vmatprep.subr.bf16.mxu0 %v722
        %786 = vmatpush1.bf16.msra.mxu0 %v721
        %787 = vmatprep.subr.bf16.mxu0 %v724
        %788 = vmatpush1.bf16.msra.mxu0 %v723
        %789 = vmatprep.mubr.bf16.mxu0 %v582
        %790 = vmatmul.mubr.bf16.gmra.mrb[0].mxu0 %v581
        %v791 = vpop.f32.mrb[0].mxu0
        %v792 = vadd.f32 %v550, %v791
        %v793 = vpop.f32.mrb[0].mxu0
        %v794 = vadd.f32 %v554, %v793
        %v795 = vpop.f32.mrb[0].mxu0
        %v796 = vadd.f32 %v550, %v795
        %v797 = vpop.f32.mrb[0].mxu0
        %v798 = vadd.f32 %v554, %v797
        %799 = vmatprep.mubr.bf16.mxu0 %v584
        %800 = vmatmul.mubr.bf16.gmra.mrb[0].mxu0 %v583
        %v801 = vpop.f32.mrb[0].mxu0
        %v802 = vadd.f32 %v550, %v801
        %v803 = vpop.f32.mrb[0].mxu0
        %v804 = vadd.f32 %v554, %v803
        %v805 = vpop.f32.mrb[0].mxu0
        %v806 = vadd.f32 %v550, %v805
        %v807 = vpop.f32.mrb[0].mxu0
        %v808 = vadd.f32 %v554, %v807
        %809 = vmatprep.mubr.bf16.mxu0 %v586
        %810 = vmatmul.mubr.bf16.gmra.mrb[0].mxu0 %v585
        %v811 = vpop.f32.mrb[0].mxu0
        %v812 = vadd.f32 %v550, %v811
        %v813 = vpop.f32.mrb[0].mxu0
        %v814 = vadd.f32 %v554, %v813
        %v815 = vpop.f32.mrb[0].mxu0
        %v816 = vadd.f32 %v550, %v815
        %v817 = vpop.f32.mrb[0].mxu0
        %v818 = vadd.f32 %v554, %v817
        %819 = vmatprep.mubr.bf16.mxu0 %v588
        %820 = vmatmul.mubr.bf16.gmra.mrb[0].mxu0 %v587
        %v821 = vpop.f32.mrb[0].mxu0
        %v822 = vadd.f32 %v550, %v821
        %v823 = vpop.f32.mrb[0].mxu0
        %v824 = vadd.f32 %v554, %v823
        %v825 = vpop.f32.mrb[0].mxu0
        %v826 = vadd.f32 %v550, %v825
        %v827 = vpop.f32.mrb[0].mxu0
        %v828 = vadd.f32 %v554, %v827
        %829 = vdwg.mxu0
        %v830 = vadd.f32 %v792, %v796
        %v831 = vadd.f32 %v830, %v802
        %v832 = vadd.f32 %v831, %v806
        %v833 = vadd.f32 %v832, %v812
        %v834 = vadd.f32 %v833, %v816
        %v835 = vadd.f32 %v834, %v822
        %v836 = vadd.f32 %v835, %v826
        %v837 = vrot.slane %v836, 4
        %v838 = vadd.f32 %v836, %v837
        %v839 = vrot.slane %v838, 2
        %v840 = vadd.f32 %v838, %v839
        %v841 = vrot.slane %v840, 1
        %v842 = vadd.f32 %v840, %v841
        %v843 = vadd.f32 %v794, %v798
        %v844 = vadd.f32 %v843, %v804
        %v845 = vadd.f32 %v844, %v808
        %v846 = vadd.f32 %v845, %v814
        %v847 = vadd.f32 %v846, %v818
        %v848 = vadd.f32 %v847, %v824
        %v849 = vadd.f32 %v848, %v828
        %v850 = vrot.slane %v849, 4
        %v851 = vadd.f32 %v849, %v850
        %v852 = vrot.slane %v851, 2
        %v853 = vadd.f32 %v851, %v852
        %v854 = vrot.slane %v853, 1
        %v855 = vadd.f32 %v853, %v854
        %v856 = vmul.f32 %v792, %v792
        %v857 = vmul.f32 %v794, %v794
        %v858 = vmul.f32 %v796, %v796
        %v859 = vmul.f32 %v798, %v798
        %v860 = vmul.f32 %v802, %v802
        %v861 = vmul.f32 %v804, %v804
        %v862 = vmul.f32 %v806, %v806
        %v863 = vmul.f32 %v808, %v808
        %v864 = vmul.f32 %v812, %v812
        %v865 = vmul.f32 %v814, %v814
        %v866 = vmul.f32 %v816, %v816
        %v867 = vmul.f32 %v818, %v818
        %v868 = vmul.f32 %v822, %v822
        %v869 = vmul.f32 %v824, %v824
        %v870 = vmul.f32 %v826, %v826
        %v871 = vmul.f32 %v828, %v828
        %v872 = vadd.f32 %v856, %v858
        %v873 = vadd.f32 %v872, %v860
        %v874 = vadd.f32 %v873, %v862
        %v875 = vadd.f32 %v874, %v864
        %v876 = vadd.f32 %v875, %v866
        %v877 = vadd.f32 %v876, %v868
        %v878 = vadd.f32 %v877, %v870
        %v879 = vrot.slane %v878, 4
        %v880 = vadd.f32 %v878, %v879
        %v881 = vrot.slane %v880, 2
        %v882 = vadd.f32 %v880, %v881
        %v883 = vrot.slane %v882, 1
        %v884 = vadd.f32 %v882, %v883
        %v885 = vadd.f32 %v857, %v859
        %v886 = vadd.f32 %v885, %v861
        %v887 = vadd.f32 %v886, %v863
        %v888 = vadd.f32 %v887, %v865
        %v889 = vadd.f32 %v888, %v867
        %v890 = vadd.f32 %v889, %v869
        %v891 = vadd.f32 %v890, %v871
        %v892 = vrot.slane %v891, 4
        %v893 = vadd.f32 %v891, %v892
        %v894 = vrot.slane %v893, 2
        %v895 = vadd.f32 %v893, %v894
        %v896 = vrot.slane %v895, 1
        %v897 = vadd.f32 %v895, %v896
        %v898 = vmul.f32 %v842, 0.015625
        %v899 = vmul.f32 %v855, 0.015625
        %v900 = vmul.f32 %v884, 0.015625
        %v901 = vmul.f32 %v897, 0.015625
        %v902 = vmul.f32 %v898, %v898
        %v903 = vmul.f32 %v899, %v899
        %v904 = vsub.f32 %v900, %v902
        %v905 = vsub.f32 %v901, %v903
        %v906 = vld [vmem:[%s419] sm:$0x3]
        %v907 = vadd.f32 %v904, 1e-05
        %v908 = vadd.f32 %v905, 1e-05
        %v909 = vrsqrt.pop %v907
        %v910 = vrsqrt.pop %v908
        %v913 = vcombine.low %v909, %v910
        %v915 = vunpack.c.l.s4 1966171168
        %v916 = vunpack.c.0.s8 %v915
        %v917 = vlaneseq
        %v918 = vshrl.u32 %v917, 7
        %v919 = vsub.s32 %v916, %v918
        %v920 = vrot.slane %v913, %v919
        %v922 = vunpack.c.l.s4 1966171168
        %v923 = vunpack.c.0.s8 %v922
        %v924 = vlaneseq
        %v925 = vshrl.u32 %v924, 7
        %v926 = vsub.s32 %v923, %v925
        %v927 = vrot.slane %v920, %v926
        %v929 = vmul.f32 %v906, %v927
        %v930 = vsub.f32 %v792, %v898
        %v931 = vsub.f32 %v794, %v899
        %v932 = vsub.f32 %v796, %v898
        %v933 = vsub.f32 %v798, %v899
        %v934 = vsub.f32 %v802, %v898
        %v935 = vsub.f32 %v804, %v899
        %v936 = vsub.f32 %v806, %v898
        %v937 = vsub.f32 %v808, %v899
        %v938 = vsub.f32 %v812, %v898
        %v939 = vsub.f32 %v814, %v899
        %v940 = vsub.f32 %v816, %v898
        %v941 = vsub.f32 %v818, %v899
        %v942 = vsub.f32 %v822, %v898
        %v943 = vsub.f32 %v824, %v899
        %v944 = vsub.f32 %v826, %v898
        %v945 = vsub.f32 %v828, %v899
        %v947 = vlaneseq
        %v948 = vshrl.u32 %v947, 7
        %v949 = vsub.s32 0, %v948
        %v950 = vrot.slane %v929, %v949
        %v951 = vlaneseq
        %v952 = vshrl.u32 %v951, 7
        %v953 = vsub.s32 1, %v952
        %v954 = vrot.slane %v929, %v953
        %v957 = vmul.f32 %v930, %v950
        %v958 = vmul.f32 %v931, %v954
        %v959 = vmul.f32 %v932, %v950
        %v960 = vmul.f32 %v933, %v954
        %v961 = vmul.f32 %v934, %v950
        %v962 = vmul.f32 %v935, %v954
        %v963 = vmul.f32 %v936, %v950
        %v964 = vmul.f32 %v937, %v954
        %v965 = vmul.f32 %v938, %v950
        %v966 = vmul.f32 %v939, %v954
        %v967 = vmul.f32 %v940, %v950
        %v968 = vmul.f32 %v941, %v954
        %v969 = vmul.f32 %v942, %v950
        %v970 = vmul.f32 %v943, %v954
        %v971 = vmul.f32 %v944, %v950
        %v972 = vmul.f32 %v945, %v954
        %v973 = vld [vmem:[%s428] sm:$0x3]
        %v975 = vlaneseq
        %v976 = vshrl.u32 %v975, 7
        %v977 = vsub.s32 0, %v976
        %v978 = vrot.slane %v973, %v977
        %v979 = vlaneseq
        %v980 = vshrl.u32 %v979, 7
        %v981 = vsub.s32 1, %v980
        %v982 = vrot.slane %v973, %v981
        %v985 = vadd.f32 %v957, %v978
        %v986 = vadd.f32 %v958, %v982
        %v987 = vadd.f32 %v959, %v978
        %v988 = vadd.f32 %v960, %v982
        %v989 = vadd.f32 %v961, %v978
        %v990 = vadd.f32 %v962, %v982
        %v991 = vadd.f32 %v963, %v978
        %v992 = vadd.f32 %v964, %v982
        %v993 = vadd.f32 %v965, %v978
        %v994 = vadd.f32 %v966, %v982
        %v995 = vadd.f32 %v967, %v978
        %v996 = vadd.f32 %v968, %v982
        %v997 = vadd.f32 %v969, %v978
        %v998 = vadd.f32 %v970, %v982
        %v999 = vadd.f32 %v971, %v978
        %v1000 = vadd.f32 %v972, %v982
        %v1001 = vmax.f32 %v985, 0.0
        %v1002 = vmax.f32 %v986, 0.0
        %v1003 = vmax.f32 %v987, 0.0
        %v1004 = vmax.f32 %v988, 0.0
        %v1005 = vmax.f32 %v989, 0.0
        %v1006 = vmax.f32 %v990, 0.0
        %v1007 = vmax.f32 %v991, 0.0
        %v1008 = vmax.f32 %v992, 0.0
        %v1009 = vmax.f32 %v993, 0.0
        %v1010 = vmax.f32 %v994, 0.0
        %v1011 = vmax.f32 %v995, 0.0
        %v1012 = vmax.f32 %v996, 0.0
        %v1013 = vmax.f32 %v997, 0.0
        %v1014 = vmax.f32 %v998, 0.0
        %v1015 = vmax.f32 %v999, 0.0
        %v1016 = vmax.f32 %v1000, 0.0
        %v1017 = vld [vmem:[#allocation2] sm:$0xff]
        %v1018 = vld [vmem:[#allocation2 + $0x8] sm:$0xff]
        %v1019 = vld [vmem:[#allocation2 + $0x10] sm:$0xff]
        %v1020 = vld [vmem:[#allocation2 + $0x18] sm:$0xff]
        %v1021 = vld [vmem:[#allocation2 + $0x20] sm:$0xff]
        %v1022 = vld [vmem:[#allocation2 + $0x28] sm:$0xff]
        %v1023 = vld [vmem:[#allocation2 + $0x30] sm:$0xff]
        %v1024 = vld [vmem:[#allocation2 + $0x38] sm:$0xff]
        %v1025 = vpack.c.bf16 %v1003, %v1001
        %v1026 = vpack.c.bf16 %v1004, %v1002
        %v1027 = vpack.c.bf16 %v1007, %v1005
        %v1028 = vpack.c.bf16 %v1008, %v1006
        %v1029 = vpack.c.bf16 %v1011, %v1009
        %v1030 = vpack.c.bf16 %v1012, %v1010
        %v1031 = vpack.c.bf16 %v1015, %v1013
        %v1032 = vpack.c.bf16 %v1016, %v1014
        %v1033 = vld [vmem:[%s437] sm:$0xf]
        %v1034 = vld [vmem:[%s437 + $0x4] sm:$0xf]
        %v1035 = vld [vmem:[%s437 + $0x8] sm:$0xf]
        %v1036 = vld [vmem:[%s437 + $0xc] sm:$0xf]
        %v1037 = vld [vmem:[%s437 + $0x10] sm:$0xf]
        %v1038 = vld [vmem:[%s437 + $0x14] sm:$0xf]
        %v1039 = vld [vmem:[%s437 + $0x18] sm:$0xf]
        %v1040 = vld [vmem:[%s437 + $0x1c] sm:$0xf]
        %v1041 = vld [vmem:[%s437 + $0x20] sm:$0xf]
        %v1042 = vld [vmem:[%s437 + $0x24] sm:$0xf]
        %v1043 = vld [vmem:[%s437 + $0x28] sm:$0xf]
        %v1044 = vld [vmem:[%s437 + $0x2c] sm:$0xf]
        %v1045 = vld [vmem:[%s437 + $0x30] sm:$0xf]
        %v1046 = vld [vmem:[%s437 + $0x34] sm:$0xf]
        %v1047 = vld [vmem:[%s437 + $0x38] sm:$0xf]
        %v1048 = vld [vmem:[%s437 + $0x3c] sm:$0xf]
        %v1049 = vld [vmem:[%s437 + $0x40] sm:$0xf]
        %v1050 = vld [vmem:[%s437 + $0x44] sm:$0xf]
        %v1051 = vld [vmem:[%s437 + $0x48] sm:$0xf]
        %v1052 = vld [vmem:[%s437 + $0x4c] sm:$0xf]
        %v1053 = vld [vmem:[%s437 + $0x50] sm:$0xf]
        %v1054 = vld [vmem:[%s437 + $0x54] sm:$0xf]
        %v1055 = vld [vmem:[%s437 + $0x58] sm:$0xf]
        %v1056 = vld [vmem:[%s437 + $0x5c] sm:$0xf]
        %v1057 = vld [vmem:[%s437 + $0x60] sm:$0xf]
        %v1058 = vld [vmem:[%s437 + $0x64] sm:$0xf]
        %v1059 = vld [vmem:[%s437 + $0x68] sm:$0xf]
        %v1060 = vld [vmem:[%s437 + $0x6c] sm:$0xf]
        %v1061 = vld [vmem:[%s437 + $0x70] sm:$0xf]
        %v1062 = vld [vmem:[%s437 + $0x74] sm:$0xf]
        %v1063 = vld [vmem:[%s437 + $0x78] sm:$0xf]
        %v1064 = vld [vmem:[%s437 + $0x7c] sm:$0xf]
        %v1097 = vunpack.c.l.b16 %v1033
        %v1098 = vunpack.c.l.b16 %v1034
        %v1099 = vunpack.c.l.b16 %v1035
        %v1100 = vunpack.c.l.b16 %v1036
        %v1101 = vunpack.c.l.b16 %v1037
        %v1102 = vunpack.c.l.b16 %v1038
        %v1103 = vunpack.c.l.b16 %v1039
        %v1104 = vunpack.c.l.b16 %v1040
        %v1105 = vunpack.c.l.b16 %v1041
        %v1106 = vunpack.c.l.b16 %v1042
        %v1107 = vunpack.c.l.b16 %v1043
        %v1108 = vunpack.c.l.b16 %v1044
        %v1109 = vunpack.c.l.b16 %v1045
        %v1110 = vunpack.c.l.b16 %v1046
        %v1111 = vunpack.c.l.b16 %v1047
        %v1112 = vunpack.c.l.b16 %v1048
        %v1113 = vunpack.c.l.b16 %v1049
        %v1114 = vunpack.c.l.b16 %v1050
        %v1115 = vunpack.c.l.b16 %v1051
        %v1116 = vunpack.c.l.b16 %v1052
        %v1117 = vunpack.c.l.b16 %v1053
        %v1118 = vunpack.c.l.b16 %v1054
        %v1119 = vunpack.c.l.b16 %v1055
        %v1120 = vunpack.c.l.b16 %v1056
        %v1121 = vunpack.c.l.b16 %v1057
        %v1122 = vunpack.c.l.b16 %v1058
        %v1123 = vunpack.c.l.b16 %v1059
        %v1124 = vunpack.c.l.b16 %v1060
        %v1125 = vunpack.c.l.b16 %v1061
        %v1126 = vunpack.c.l.b16 %v1062
        %v1127 = vunpack.c.l.b16 %v1063
        %v1128 = vunpack.c.l.b16 %v1064
        %v1129 = vpack.c.b16 %v1098, %v1097
        %v1130 = vpack.c.b16 %v1100, %v1099
        %v1131 = vpack.c.b16 %v1102, %v1101
        %v1132 = vpack.c.b16 %v1104, %v1103
        %v1133 = vpack.c.b16 %v1106, %v1105
        %v1134 = vpack.c.b16 %v1108, %v1107
        %v1135 = vpack.c.b16 %v1110, %v1109
        %v1136 = vpack.c.b16 %v1112, %v1111
        %v1137 = vpack.c.b16 %v1114, %v1113
        %v1138 = vpack.c.b16 %v1116, %v1115
        %v1139 = vpack.c.b16 %v1118, %v1117
        %v1140 = vpack.c.b16 %v1120, %v1119
        %v1141 = vpack.c.b16 %v1122, %v1121
        %v1142 = vpack.c.b16 %v1124, %v1123
        %v1143 = vpack.c.b16 %v1126, %v1125
        %v1144 = vpack.c.b16 %v1128, %v1127
        %1161 = vmatprep.subr.bf16.mxu0 0
        %1162 = vmatpush1.bf16.msra.mxu0 %v1129
        %1163 = vmatprep.subr.bf16.mxu0 0
        %1164 = vmatpush1.bf16.msra.mxu0 %v1130
        %1165 = vmatprep.subr.bf16.mxu0 0
        %1166 = vmatpush1.bf16.msra.mxu0 %v1131
        %1167 = vmatprep.subr.bf16.mxu0 0
        %1168 = vmatpush1.bf16.msra.mxu0 %v1132
        %1169 = vmatprep.subr.bf16.mxu0 0
        %1170 = vmatpush1.bf16.msra.mxu0 %v1133
        %1171 = vmatprep.subr.bf16.mxu0 0
        %1172 = vmatpush1.bf16.msra.mxu0 %v1134
        %1173 = vmatprep.subr.bf16.mxu0 0
        %1174 = vmatpush1.bf16.msra.mxu0 %v1135
        %1175 = vmatprep.subr.bf16.mxu0 0
        %1176 = vmatpush1.bf16.msra.mxu0 %v1136
        %1177 = vmatprep.subr.bf16.mxu0 0
        %1178 = vmatpush1.bf16.msra.mxu0 %v1137
        %1179 = vmatprep.subr.bf16.mxu0 0
        %1180 = vmatpush1.bf16.msra.mxu0 %v1138
        %1181 = vmatprep.subr.bf16.mxu0 0
        %1182 = vmatpush1.bf16.msra.mxu0 %v1139
        %1183 = vmatprep.subr.bf16.mxu0 0
        %1184 = vmatpush1.bf16.msra.mxu0 %v1140
        %1185 = vmatprep.subr.bf16.mxu0 0
        %1186 = vmatpush1.bf16.msra.mxu0 %v1141
        %1187 = vmatprep.subr.bf16.mxu0 0
        %1188 = vmatpush1.bf16.msra.mxu0 %v1142
        %1189 = vmatprep.subr.bf16.mxu0 0
        %1190 = vmatpush1.bf16.msra.mxu0 %v1143
        %1191 = vmatprep.subr.bf16.mxu0 0
        %1192 = vmatpush1.bf16.msra.mxu0 %v1144
        %1193 = vmatprep.mubr.bf16.mxu0 %v1026
        %1194 = vmatmul.mubr.bf16.gmra.mrb[0].mxu0 %v1025
        %v1195 = vpop.f32.mrb[0].mxu0
        %v1196 = vadd.f32 0.0, %v1195
        %v1197 = vpop.f32.mrb[0].mxu0
        %v1198 = vpop.f32.mrb[0].mxu0
        %v1199 = vadd.f32 0.0, %v1198
        %v1200 = vpop.f32.mrb[0].mxu0
        %1201 = vmatprep.mubr.bf16.mxu0 %v1028
        %1202 = vmatmul.mubr.bf16.gmra.mrb[0].mxu0 %v1027
        %v1203 = vpop.f32.mrb[0].mxu0
        %v1204 = vadd.f32 0.0, %v1203
        %v1205 = vpop.f32.mrb[0].mxu0
        %v1206 = vpop.f32.mrb[0].mxu0
        %v1207 = vadd.f32 0.0, %v1206
        %v1208 = vpop.f32.mrb[0].mxu0
        %1209 = vmatprep.mubr.bf16.mxu0 %v1030
        %1210 = vmatmul.mubr.bf16.gmra.mrb[0].mxu0 %v1029
        %v1211 = vpop.f32.mrb[0].mxu0
        %v1212 = vadd.f32 0.0, %v1211
        %v1213 = vpop.f32.mrb[0].mxu0
        %v1214 = vpop.f32.mrb[0].mxu0
        %v1215 = vadd.f32 0.0, %v1214
        %v1216 = vpop.f32.mrb[0].mxu0
        %1217 = vmatprep.mubr.bf16.mxu0 %v1032
        %1218 = vmatmul.mubr.bf16.gmra.mrb[0].mxu0 %v1031
        %v1219 = vpop.f32.mrb[0].mxu0
        %v1220 = vadd.f32 0.0, %v1219
        %v1221 = vpop.f32.mrb[0].mxu0
        %v1222 = vpop.f32.mrb[0].mxu0
        %v1223 = vadd.f32 0.0, %v1222
        %v1224 = vpop.f32.mrb[0].mxu0
        %1225 = vdwg.mxu0
        %v1226 = vadd.f32 %v1017, %v1196
        %v1227 = vadd.f32 %v1018, %v1199
        %v1228 = vadd.f32 %v1019, %v1204
        %v1229 = vadd.f32 %v1020, %v1207
        %v1230 = vadd.f32 %v1021, %v1212
        %v1231 = vadd.f32 %v1022, %v1215
        %v1232 = vadd.f32 %v1023, %v1220
        %v1233 = vadd.f32 %v1024, %v1223
        %1234 = vst [vmem:[#allocation2] sm:$0xff] %v1226
        %1235 = vst [vmem:[#allocation2 + $0x8] sm:$0xff] %v1227
        %1236 = vst [vmem:[#allocation2 + $0x10] sm:$0xff] %v1228
        %1237 = vst [vmem:[#allocation2 + $0x18] sm:$0xff] %v1229
        %1238 = vst [vmem:[#allocation2 + $0x20] sm:$0xff] %v1230
        %1239 = vst [vmem:[#allocation2 + $0x28] sm:$0xff] %v1231
        %1240 = vst [vmem:[#allocation2 + $0x30] sm:$0xff] %v1232
        %1241 = vst [vmem:[#allocation2 + $0x38] sm:$0xff] %v1233
        %p1242 = scmp.eq.s32.totalorder %s34, 1
        // Predicated region
        $region81: #{tpu_custom_call.1} parent=47 // pred_check
          %p1243 = pneg %p1242
        $region82: #{tpu_custom_call.1} parent=47 // pred_check_branch
          %1245 = sbr.rel (%p1243) target = $region84
        $region83: #{tpu_custom_call.1} parent=47 // pred_region
          %v1246 = vld [vmem:[#allocation2] sm:$0xff]
          %v1247 = vld [vmem:[#allocation2 + $0x8] sm:$0xff]
          %v1248 = vld [vmem:[#allocation2 + $0x10] sm:$0xff]
          %v1249 = vld [vmem:[#allocation2 + $0x18] sm:$0xff]
          %v1250 = vld [vmem:[#allocation2 + $0x20] sm:$0xff]
          %v1251 = vld [vmem:[#allocation2 + $0x28] sm:$0xff]
          %v1252 = vld [vmem:[#allocation2 + $0x30] sm:$0xff]
          %v1253 = vld [vmem:[#allocation2 + $0x38] sm:$0xff]
          %v1254 = vld [vmem:[#allocation14] sm:$0x1]
          %v1256 = vlaneseq
          %v1257 = vshrl.u32 %v1256, 7
          %v1258 = vsub.s32 0, %v1257
          %v1259 = vrot.slane %v1254, %v1258
          %v1261 = vadd.f32 %v1246, %v1259
          %v1262 = vadd.f32 %v1247, %v1259
          %v1263 = vadd.f32 %v1248, %v1259
          %v1264 = vadd.f32 %v1249, %v1259
          %v1265 = vadd.f32 %v1250, %v1259
          %v1266 = vadd.f32 %v1251, %v1259
          %v1267 = vadd.f32 %v1252, %v1259
          %v1268 = vadd.f32 %v1253, %v1259
          %1269 = vst [vmem:[#allocation15] sm:$0xff] %v1261
          %1270 = vst [vmem:[#allocation15 + $0x8] sm:$0xff] %v1262
          %1271 = vst [vmem:[#allocation15 + $0x10] sm:$0xff] %v1263
          %1272 = vst [vmem:[#allocation15 + $0x18] sm:$0xff] %v1264
          %1273 = vst [vmem:[#allocation15 + $0x20] sm:$0xff] %v1265
          %1274 = vst [vmem:[#allocation15 + $0x28] sm:$0xff] %v1266
          %1275 = vst [vmem:[#allocation15 + $0x30] sm:$0xff] %v1267
          %1276 = vst [vmem:[#allocation15 + $0x38] sm:$0xff] %v1268
        $region84: #{tpu_custom_call.1} parent=47 // pred_fallthru
          _
        // Predicated region
        $region85: #{tpu_custom_call.1} parent=47 // pred_check
          %p1277 = pneg %p238
        $region86: #{tpu_custom_call.1} parent=47 // pred_check_branch
          %1279 = sbr.rel (%p1277) target = $region88
        $region87: #{tpu_custom_call.1} parent=47 // pred_region
          %s1281 = ssub.s32 1024, 1024
          %1282 = vsyncadd [#allocation5], %s1281
          %s1283 = smul.addr %s33, 128
          %s1284 = scalar_lea.hbm %s7, %s1283
          %s1285 = sshll.u32 [#allocation15], 4
          %s1286 = int_to_ptr.vmem [resolvable:$true] %s1285
          %1291 = dma.vmem_to_hbm [thread:$0]  %s1286, 1024, %s1284, [#allocation5], 128, 128, 8
        $region88: #{tpu_custom_call.1} parent=47 // pred_fallthru
          _
        // Predicated region
        $region89: #{tpu_custom_call.1} parent=47 // pred_check
          %p1292 = pneg %p238
        $region90: #{tpu_custom_call.1} parent=47 // pred_check_branch
          %1294 = sbr.rel (%p1292) target = $region92
        $region91: #{tpu_custom_call.1} parent=47 // pred_region
          %1295 = dma.done [#allocation5], 1024
        $region92: #{tpu_custom_call.1} parent=47 // pred_fallthru
          _
      $region48: #{tpu_custom_call.1} parent=5 // pred_fallthru
        _
      %p1296 = scmp.le.s32.totalorder 2, %s24
      // Predicated region
      $region93: #{tpu_custom_call.1} parent=5 // pred_check
        %p1297 = pneg %p1296
      $region94: #{tpu_custom_call.1} parent=5 // pred_check_branch
        %1299 = sbr.rel (%p1297) target = $region96
      $region95: #{tpu_custom_call.1} parent=5 // pred_region
        %s1300 = ssub.s32 %s24, 2
      $region96: #{tpu_custom_call.1} parent=5 // pred_fallthru
        _
    $region6: #{tpu_custom_call.1} parent=1 // loop_footer
      %s28 = sadd.s32 1, %s24
    $region7: #{tpu_custom_call.1} parent=1 // loop_footer_branch
      %23 = sbr.rel target = $region3
    $region8: #{tpu_custom_call.1} parent=1 // loop_exit
      _
    %1301 = vsyncpa [#allocation4], 1
    %s1302 = scalar_lea.sflag [#allocation4], 1
    %1303 = vsyncpa %s1302, 1
    %1304 = vsyncpa [#allocation7], 1
    %s1305 = scalar_lea.sflag [#allocation7], 1
    %1306 = vsyncpa %s1305, 1
    %1307 = vsyncpa [#allocation10], 1
    %s1308 = scalar_lea.sflag [#allocation10], 1
    %1309 = vsyncpa %s1308, 1
    %1310 = vsyncpa [#allocation13], 1
    %s1311 = scalar_lea.sflag [#allocation13], 1
    %1312 = vsyncpa %s1311, 1
    %1313 = vsyncpa [#allocation5], 1
    %s1314 = scalar_lea.sflag [#allocation5], 1
    %1315 = vsyncpa %s1314, 1

</llo_original>
